<compile_context>
chip_gen: v5e
topology: v5e:2x2
jax: 0.10.0
libtpu: 0.0.40
codegen_flags: <defaults>
</compile_context>

<pallas_src>
import jax
import jax.numpy as jnp
from jax.experimental import pallas as pl
from jax.experimental.pallas import tpu as pltpu


def _round_up(n, m):
    return (n + m - 1) // m * m


def make_resmlp_kernel(has_proj):
    """Fused kernel for the whole ResMLP.

    has_proj[i] == True  -> block i's residual projection was folded into its
                            weight (single dot, no explicit identity add).
    has_proj[i] == False -> block i adds the identity (h) to the dot result.
    Weights arrive pre-transposed as (in_features_padded, out_features_padded).
    """

    def kernel(x_ref, *refs):
        out_ref = refs[-1]
        w_refs = refs[:-1]
        h = x_ref[...]
        for idx, hp in enumerate(has_proj):
            w = w_refs[idx][...]
            y = jnp.dot(h, w, preferred_element_type=jnp.float32)
            if not hp:
                y = y + h.astype(jnp.float32)      # identity residual
            h = jnp.maximum(y, 0.0).astype(x_ref.dtype)   # ReLU
        wf = w_refs[len(has_proj)][...]
        out_ref[...] = jnp.dot(
            h, wf, preferred_element_type=jnp.float32).astype(out_ref.dtype)

    return kernel


def resmlp_forward_pallas(x, block_params, final_w, *, lane=128, max_tb=512):
    """block_params: list of (w2, wr_or_None) per ResBasicLinearBlock.

    Weights are PyTorch-style (out_features, in_features).
    """
    dtype = x.dtype
    itemsize = jnp.dtype(dtype).itemsize
    B, in_dim = x.shape

    # ---- fold residual projections, record per-block structure -------------
    folded = []
    has_proj = []
    dims = [in_dim]
    for (w2, wr) in block_params:
        w = w2 if wr is None else (w2 + wr)   # h@W2.T + h@Wr.T == h@(W2+Wr).T
        folded.append(w)
        has_proj.append(wr is not None)
        dims.append(w.shape[0])
    folded.append(final_w)
    dims.append(final_w.shape[0])

    # ---- pad feature dims to lane multiples, pre-transpose to (in, out) ----
    pdims = [_round_up(d, lane) for d in dims]
    weights = []
    for li, w in enumerate(folded):
        out_d, in_d = w.shape
        wp = jnp.zeros((pdims[li], pdims[li + 1]), dtype)
        wp = wp.at[:in_d, :out_d].set(w.T.astype(dtype))
        weights.append(wp)

    # ---- batch tiling -------------------------------------------------------
    TB = min(max_tb, _round_up(B, 8))
    B_pad = _round_up(B, TB)
    xp = jnp.zeros((B_pad, pdims[0]), dtype).at[:B, :in_dim].set(x)

    out_dim = dims[-1]
    out_dim_p = pdims[-1]
    grid = (B_pad // TB,)

    in_specs = [pl.BlockSpec((TB, pdims[0]), lambda i: (i, 0))]
    for w in weights:
        in_specs.append(pl.BlockSpec(w.shape, lambda i: (0, 0)))  # resident
    out_specs = pl.BlockSpec((TB, out_dim_p), lambda i: (i, 0))

    # ---- cost estimate + VMEM budget ---------------------------------------
    flops = 2 * B_pad * sum(pdims[i] * pdims[i + 1] for i in range(len(weights)))
    bytes_accessed = (xp.size + sum(w.size for w in weights)
                      + B_pad * out_dim_p) * itemsize
    cost = pl.CostEstimate(flops=flops, transcendentals=0,
                           bytes_accessed=bytes_accessed)

    weight_bytes = sum(w.size for w in weights) * itemsize
    act_bytes = 2 * TB * max(pdims) * 4                      # f32 intermediates
    io_bytes = 2 * (TB * pdims[0] + TB * out_dim_p) * itemsize  # dbl-buffered tiles
    vmem_limit = min(64 * 1024 * 1024,
                     max(int(1.5 * (weight_bytes + act_bytes + io_bytes)),
                         16 * 1024 * 1024))

    kernel = make_resmlp_kernel(tuple(has_proj))
    out_p = pl.pallas_call(
        kernel,
        out_shape=jax.ShapeDtypeStruct((B_pad, out_dim_p), dtype),
        grid=grid,
        in_specs=in_specs,
        out_specs=out_specs,
        compiler_params=pltpu.CompilerParams(
            dimension_semantics=("parallel",),
            vmem_limit_bytes=vmem_limit),
        cost_estimate=cost,
    )(xp, *weights)

    return out_p[:B, :out_dim]


def resmlp_forward_ref(x, block_params, final_w):
    """Pure-JAX reference mirroring the PyTorch forward exactly (no folding)."""
    h = x.astype(jnp.float32)
    for (w2, wr) in block_params:
        out = h @ w2.T
        identity = h if wr is None else h @ wr.T
        h = jnp.maximum(out + identity, 0.0)
    return (h @ final_w.T).astype(x.dtype)


def init_resmlp_params(key, in_dim, layer_dims):
    """Deterministic parameter init (shapes follow ResMLP.__init__)."""
    block_params = []
    d_in = in_dim
    for dim in layer_dims[:-1]:
        key, k1, k2, k3 = jax.random.split(key, 4)
        # linear1 exists in the module but its output is discarded in forward.
        w2 = (jax.random.normal(k2, (dim, d_in), jnp.float32) *
              (1.0 / jnp.sqrt(d_in)))                      # linear2: d_in -> dim
        wr = None
        if d_in != dim:
            wr = (jax.random.normal(k3, (dim, d_in), jnp.float32) *
                  (1.0 / jnp.sqrt(d_in)))                  # residual_linear
        block_params.append((w2, wr))
        d_in = dim
    key, kf = jax.random.split(key)
    final_w = (jax.random.normal(kf, (layer_dims[-1], d_in), jnp.float32) *
               (1.0 / jnp.sqrt(d_in)))
    return block_params, final_w


if __name__ == "__main__":
    key = jax.random.PRNGKey(0)
    batch = 8
    in_dim = 16
    layer_dims = (32, 32, 8)   # two ResBasicLinearBlocks + final bias-free Linear

    key, kx = jax.random.split(key)
    x = jax.random.normal(kx, (batch, in_dim), jnp.float32)

    block_params, final_w = init_resmlp_params(key, in_dim, layer_dims)

    y = resmlp_forward_pallas(x, block_params, final_w)
    y = jax.block_until_ready(y)

    y_ref = resmlp_forward_ref(x, block_params, final_w)
    assert y.shape == (batch, layer_dims[-1])
    assert jnp.allclose(y, y_ref, atol=1e-4, rtol=1e-4), "mismatch vs reference"

    print("KERNEL_OK")
</pallas_src>

<mosaic_0001>
module attributes {stable_mosaic.version = 11 : i64} {
  func.func @kernel(%arg0: i32, %arg1: memref<8x128xf32, #tpu.memory_space<vmem>>, %arg2: memref<128x128xf32, #tpu.memory_space<vmem>>, %arg3: memref<128x128xf32, #tpu.memory_space<vmem>>, %arg4: memref<128x128xf32, #tpu.memory_space<vmem>>, %arg5: memref<8x128xf32, #tpu.memory_space<vmem>>) attributes {dimension_semantics = [#tpu.dimension_semantics<parallel>], iteration_bounds = array<i64: 1>, scalar_prefetch = 0 : i64, scratch_operands = 0 : i64, tpu.core_type = #tpu.core_type<tc>, window_params = [{transform_indices = @transform_0, window_bounds = array<i64: 8, 128>}, {pipeline_mode = #tpu.pipeline_mode<synchronous>, transform_indices = @transform_1, window_bounds = array<i64: 128, 128>}, {pipeline_mode = #tpu.pipeline_mode<synchronous>, transform_indices = @transform_2, window_bounds = array<i64: 128, 128>}, {pipeline_mode = #tpu.pipeline_mode<synchronous>, transform_indices = @transform_3, window_bounds = array<i64: 128, 128>}, {transform_indices = @transform_4, window_bounds = array<i64: 8, 128>}]} {
    %c0 = arith.constant 0 : index
    %c0_0 = arith.constant 0 : index
    %0 = vector.load %arg1[%c0, %c0_0] : memref<8x128xf32, #tpu.memory_space<vmem>>, vector<8x128xf32>
    %c0_1 = arith.constant 0 : index
    %c0_2 = arith.constant 0 : index
    %1 = vector.load %arg2[%c0_1, %c0_2] : memref<128x128xf32, #tpu.memory_space<vmem>>, vector<128x128xf32>
    %cst = arith.constant dense<0.000000e+00> : vector<8x128xf32>
    %2 = tpu.matmul %0, %1, %cst {dimension_numbers = #tpu.dot_dimension_numbers<[1], [0], [0], [1], [0, 0, 1, 1], [], []>} : vector<8x128xf32>, vector<128x128xf32>, vector<8x128xf32> -> vector<8x128xf32>
    %cst_3 = arith.constant 0.000000e+00 : f32
    %3 = vector.broadcast %cst_3 : f32 to vector<8x128xf32>
    %4 = arith.maximumf %2, %3 : vector<8x128xf32>
    %c0_4 = arith.constant 0 : index
    %c0_5 = arith.constant 0 : index
    %5 = vector.load %arg3[%c0_4, %c0_5] : memref<128x128xf32, #tpu.memory_space<vmem>>, vector<128x128xf32>
    %cst_6 = arith.constant dense<0.000000e+00> : vector<8x128xf32>
    %6 = tpu.matmul %4, %5, %cst_6 {dimension_numbers = #tpu.dot_dimension_numbers<[1], [0], [0], [1], [0, 0, 1, 1], [], []>} : vector<8x128xf32>, vector<128x128xf32>, vector<8x128xf32> -> vector<8x128xf32>
    %7 = arith.addf %6, %4 : vector<8x128xf32>
    %cst_7 = arith.constant 0.000000e+00 : f32
    %8 = vector.broadcast %cst_7 : f32 to vector<8x128xf32>
    %9 = arith.maximumf %7, %8 : vector<8x128xf32>
    %c0_8 = arith.constant 0 : index
    %c0_9 = arith.constant 0 : index
    %10 = vector.load %arg4[%c0_8, %c0_9] : memref<128x128xf32, #tpu.memory_space<vmem>>, vector<128x128xf32>
    %cst_10 = arith.constant dense<0.000000e+00> : vector<8x128xf32>
    %11 = tpu.matmul %9, %10, %cst_10 {dimension_numbers = #tpu.dot_dimension_numbers<[1], [0], [0], [1], [0, 0, 1, 1], [], []>} : vector<8x128xf32>, vector<128x128xf32>, vector<8x128xf32> -> vector<8x128xf32>
    %c0_11 = arith.constant 0 : index
    %c0_12 = arith.constant 0 : index
    %12 = vector.load %arg5[%c0_11, %c0_12] : memref<8x128xf32, #tpu.memory_space<vmem>>, vector<8x128xf32>
    tpu.vector_store %arg5[%c0_11, %c0_12], %11 {strides = array<i32>} : memref<8x128xf32, #tpu.memory_space<vmem>>, vector<8x128xf32>,
    return
  }
  func.func @transform_0(%arg0: i32) -> (i32, i32) {
    %c0_i32 = arith.constant 0 : i32
    %c0_i32_0 = arith.constant 0 : i32
    return %arg0, %c0_i32 : i32, i32
  }
  func.func @transform_1(%arg0: i32) -> (i32, i32) {
    %c0_i32 = arith.constant 0 : i32
    %c0_i32_0 = arith.constant 0 : i32
    %c0_i32_1 = arith.constant 0 : i32
    return %c0_i32, %c0_i32_0 : i32, i32
  }
  func.func @transform_2(%arg0: i32) -> (i32, i32) {
    %c0_i32 = arith.constant 0 : i32
    %c0_i32_0 = arith.constant 0 : i32
    %c0_i32_1 = arith.constant 0 : i32
    return %c0_i32, %c0_i32_0 : i32, i32
  }
  func.func @transform_3(%arg0: i32) -> (i32, i32) {
    %c0_i32 = arith.constant 0 : i32
    %c0_i32_0 = arith.constant 0 : i32
    %c0_i32_1 = arith.constant 0 : i32
    return %c0_i32, %c0_i32_0 : i32, i32
  }
  func.func @transform_4(%arg0: i32) -> (i32, i32) {
    %c0_i32 = arith.constant 0 : i32
    %c0_i32_0 = arith.constant 0 : i32
    return %arg0, %c0_i32 : i32, i32
  }
}

</mosaic_0001>

<llo_original>
// kernel: tpu_custom_call.1
$region0: #{tpu_custom_call.1}
  #allocation0 [shape = 'u32[]', space=smem, size = 0x4, offset = 0x4, fixed_abs, tag = 'smem constant byte address 0x4 - core index']
  #allocation1 [shape = 'u32[72,128]{1,0:T(1,128)}', space=vmem, size = 0x9000, scoped, tag = 'internal scratch']
  %s0 = inlined_call_operand.hbm [shape: f32[8,128], index: 0, kind: input, shape index: {}]
  %s1 = inlined_call_operand.hbm [shape: f32[128,128], index: 1, kind: input, shape index: {}]
  %s2 = inlined_call_operand.hbm [shape: f32[128,128], index: 2, kind: input, shape index: {}]
  %s3 = inlined_call_operand.hbm [shape: f32[128,128], index: 3, kind: input, shape index: {}]
  %s4 = inlined_call_operand.hbm [shape: f32[8,128], index: 4, kind: output, shape index: {}]
  %s5 = sld [smem:[#allocation0]]
  $region42: #{tpu_custom_call.1} parent=0
    _
  %s7 = ssub.s32 1, %s5
  %s8 = scalar_select 0, %s7, %s5
  $region1: #{tpu_custom_call.1} parent=0
    #allocation2 [shape = 'u8[4096]{0}', space=vmem, size = 0x1000, scoped, tag = 'input window, operand 0, single buffered']
    #allocation3 [shape = 's32[1]{0}', space=sflag, size = 0x4, scoped, tag = 'scoped memory for tpu_custom_call.1']
    #allocation4 [shape = 's32[1]{0}', space=sflag, size = 0x4, scoped, tag = 'scoped memory for tpu_custom_call.1']
    #allocation5 [shape = 'u8[65536]{0}', space=vmem, size = 0x10000, scoped, tag = 'input window, operand 1, single buffered']
    #allocation6 [shape = 's32[1]{0}', space=sflag, size = 0x4, scoped, tag = 'scoped memory for tpu_custom_call.1']
    #allocation7 [shape = 'u8[65536]{0}', space=vmem, size = 0x10000, scoped, tag = 'input window, operand 2, single buffered']
    #allocation8 [shape = 'u8[65536]{0}', space=vmem, size = 0x10000, scoped, tag = 'input window, operand 3, single buffered']
    #allocation9 [shape = 's32[1]{0}', space=sflag, size = 0x4, scoped, tag = 'scoped memory for tpu_custom_call.1']
    #allocation10 [shape = 'u8[4096]{0}', space=vmem, size = 0x1000, scoped, tag = 'output window, operand 0, single buffered']
    %9 = vsyncpa [#allocation3], 0
    %10 = vsyncpa [#allocation6], 0
    %11 = vsyncpa [#allocation9], 0
    %12 = vsyncpa [#allocation4], 0
    // Predicated region
    $region2: #{tpu_custom_call.1} parent=1 // pred_check
      _
    $region3: #{tpu_custom_call.1} parent=1 // pred_check_branch
      %14 = sbr.rel (0) target = $region5
    $region4: #{tpu_custom_call.1} parent=1 // pred_region
      %16 = vsyncadd [#allocation3], 0
      %s18 = sshll.u32 %s0, 4
      %s19 = int_to_ptr.hbm [resolvable:$true] %s18
      %s20 = sshll.u32 [#allocation2], 4
      %s21 = int_to_ptr.vmem [resolvable:$true] %s20
      %23 = dma.hbm_to_vmem [thread:$0]  %s19, 128, %s21, [#allocation3]
    $region5: #{tpu_custom_call.1} parent=1 // pred_fallthru
      _
    // Predicated region
    $region6: #{tpu_custom_call.1} parent=1 // pred_check
      _
    $region7: #{tpu_custom_call.1} parent=1 // pred_check_branch
      %25 = sbr.rel (0) target = $region9
    $region8: #{tpu_custom_call.1} parent=1 // pred_region
      %27 = vsyncadd [#allocation6], 0
      %s28 = sshll.u32 %s1, 4
      %s29 = int_to_ptr.hbm [resolvable:$true] %s28
      %s30 = sshll.u32 [#allocation5], 4
      %s31 = int_to_ptr.vmem [resolvable:$true] %s30
      %36 = dma.hbm_to_vmem [thread:$0]  %s29, 2048, %s31, [#allocation6], 128, 128, 8
    $region9: #{tpu_custom_call.1} parent=1 // pred_fallthru
      _
    // Predicated region
    $region10: #{tpu_custom_call.1} parent=1 // pred_check
      _
    $region11: #{tpu_custom_call.1} parent=1 // pred_check_branch
      %38 = sbr.rel (0) target = $region13
    $region12: #{tpu_custom_call.1} parent=1 // pred_region
      %40 = vsyncadd [#allocation6], 0
      %s41 = sshll.u32 %s2, 4
      %s42 = int_to_ptr.hbm [resolvable:$true] %s41
      %s43 = sshll.u32 [#allocation7], 4
      %s44 = int_to_ptr.vmem [resolvable:$true] %s43
      %49 = dma.hbm_to_vmem [thread:$0]  %s42, 2048, %s44, [#allocation6], 128, 128, 8
    $region13: #{tpu_custom_call.1} parent=1 // pred_fallthru
      _
    // Predicated region
    $region14: #{tpu_custom_call.1} parent=1 // pred_check
      _
    $region15: #{tpu_custom_call.1} parent=1 // pred_check_branch
      %51 = sbr.rel (0) target = $region17
    $region16: #{tpu_custom_call.1} parent=1 // pred_region
      %53 = vsyncadd [#allocation9], 0
      %s54 = sshll.u32 %s3, 4
      %s55 = int_to_ptr.hbm [resolvable:$true] %s54
      %s56 = sshll.u32 [#allocation8], 4
      %s57 = int_to_ptr.vmem [resolvable:$true] %s56
      %62 = dma.hbm_to_vmem [thread:$0]  %s55, 2048, %s57, [#allocation9], 128, 128, 8
    $region17: #{tpu_custom_call.1} parent=1 // pred_fallthru
      _
    // Predicated region
    $region18: #{tpu_custom_call.1} parent=1 // pred_check
      _
    $region19: #{tpu_custom_call.1} parent=1 // pred_check_branch
      %64 = sbr.rel (0) target = $region21
    $region20: #{tpu_custom_call.1} parent=1 // pred_region
      %66 = dma.done [#allocation3], 128
    $region21: #{tpu_custom_call.1} parent=1 // pred_fallthru
      _
    // Predicated region
    $region22: #{tpu_custom_call.1} parent=1 // pred_check
      _
    $region23: #{tpu_custom_call.1} parent=1 // pred_check_branch
      %68 = sbr.rel (0) target = $region25
    $region24: #{tpu_custom_call.1} parent=1 // pred_region
      %70 = dma.done [#allocation6], 2048
    $region25: #{tpu_custom_call.1} parent=1 // pred_fallthru
      _
    // Predicated region
    $region26: #{tpu_custom_call.1} parent=1 // pred_check
      _
    $region27: #{tpu_custom_call.1} parent=1 // pred_check_branch
      %72 = sbr.rel (0) target = $region29
    $region28: #{tpu_custom_call.1} parent=1 // pred_region
      %74 = dma.done [#allocation6], 2048
    $region29: #{tpu_custom_call.1} parent=1 // pred_fallthru
      _
    // Predicated region
    $region30: #{tpu_custom_call.1} parent=1 // pred_check
      _
    $region31: #{tpu_custom_call.1} parent=1 // pred_check_branch
      %76 = sbr.rel (0) target = $region33
    $region32: #{tpu_custom_call.1} parent=1 // pred_region
      %78 = dma.done [#allocation9], 2048
    $region33: #{tpu_custom_call.1} parent=1 // pred_fallthru
      _
    %v79 = vld [vmem:[#allocation2] sm:$0xff]
    %v80 = vld [vmem:[#allocation5] sm:$0xff]
    %v81 = vld [vmem:[#allocation5 + $0x8] sm:$0xff]
    %v82 = vld [vmem:[#allocation5 + $0x10] sm:$0xff]
    %v83 = vld [vmem:[#allocation5 + $0x18] sm:$0xff]
    %v84 = vld [vmem:[#allocation5 + $0x20] sm:$0xff]
    %v85 = vld [vmem:[#allocation5 + $0x28] sm:$0xff]
    %v86 = vld [vmem:[#allocation5 + $0x30] sm:$0xff]
    %v87 = vld [vmem:[#allocation5 + $0x38] sm:$0xff]
    %v88 = vld [vmem:[#allocation5 + $0x40] sm:$0xff]
    %v89 = vld [vmem:[#allocation5 + $0x48] sm:$0xff]
    %v90 = vld [vmem:[#allocation5 + $0x50] sm:$0xff]
    %v91 = vld [vmem:[#allocation5 + $0x58] sm:$0xff]
    %v92 = vld [vmem:[#allocation5 + $0x60] sm:$0xff]
    %v93 = vld [vmem:[#allocation5 + $0x68] sm:$0xff]
    %v94 = vld [vmem:[#allocation5 + $0x70] sm:$0xff]
    %v95 = vld [vmem:[#allocation5 + $0x78] sm:$0xff]
    %96 = vmatpush.msra.mxu0 %v95
    %97 = vmatpush.msra.mxu0 %v94
    %98 = vmatpush.msra.mxu0 %v93
    %99 = vmatpush.msra.mxu0 %v92
    %100 = vmatpush.msra.mxu0 %v91
    %101 = vmatpush.msra.mxu0 %v90
    %102 = vmatpush.msra.mxu0 %v89
    %103 = vmatpush.msra.mxu0 %v88
    %104 = vmatpush.msra.mxu0 %v87
    %105 = vmatpush.msra.mxu0 %v86
    %106 = vmatpush.msra.mxu0 %v85
    %107 = vmatpush.msra.mxu0 %v84
    %108 = vmatpush.msra.mxu0 %v83
    %109 = vmatpush.msra.mxu0 %v82
    %110 = vmatpush.msra.mxu0 %v81
    %111 = vmatpush.msra.mxu0 %v80
    %112 = vmatmul.f32.gmra.mxu0 %v79
    %v113 = vpop.f32.mrf.mxu0
    %v114 = vadd.f32 0.0, %v113
    %115 = vdwg.mxu0
    %v116 = vmax.f32 %v114, 0.0
    %v117 = vld [vmem:[#allocation7] sm:$0xff]
    %v118 = vld [vmem:[#allocation7 + $0x8] sm:$0xff]
    %v119 = vld [vmem:[#allocation7 + $0x10] sm:$0xff]
    %v120 = vld [vmem:[#allocation7 + $0x18] sm:$0xff]
    %v121 = vld [vmem:[#allocation7 + $0x20] sm:$0xff]
    %v122 = vld [vmem:[#allocation7 + $0x28] sm:$0xff]
    %v123 = vld [vmem:[#allocation7 + $0x30] sm:$0xff]
    %v124 = vld [vmem:[#allocation7 + $0x38] sm:$0xff]
    %v125 = vld [vmem:[#allocation7 + $0x40] sm:$0xff]
    %v126 = vld [vmem:[#allocation7 + $0x48] sm:$0xff]
    %v127 = vld [vmem:[#allocation7 + $0x50] sm:$0xff]
    %v128 = vld [vmem:[#allocation7 + $0x58] sm:$0xff]
    %v129 = vld [vmem:[#allocation7 + $0x60] sm:$0xff]
    %v130 = vld [vmem:[#allocation7 + $0x68] sm:$0xff]
    %v131 = vld [vmem:[#allocation7 + $0x70] sm:$0xff]
    %v132 = vld [vmem:[#allocation7 + $0x78] sm:$0xff]
    %133 = vmatpush.msra.mxu0 %v132
    %134 = vmatpush.msra.mxu0 %v131
    %135 = vmatpush.msra.mxu0 %v130
    %136 = vmatpush.msra.mxu0 %v129
    %137 = vmatpush.msra.mxu0 %v128
    %138 = vmatpush.msra.mxu0 %v127
    %139 = vmatpush.msra.mxu0 %v126
    %140 = vmatpush.msra.mxu0 %v125
    %141 = vmatpush.msra.mxu0 %v124
    %142 = vmatpush.msra.mxu0 %v123
    %143 = vmatpush.msra.mxu0 %v122
    %144 = vmatpush.msra.mxu0 %v121
    %145 = vmatpush.msra.mxu0 %v120
    %146 = vmatpush.msra.mxu0 %v119
    %147 = vmatpush.msra.mxu0 %v118
    %148 = vmatpush.msra.mxu0 %v117
    %149 = vmatmul.f32.gmra.mxu0 %v116
    %v150 = vpop.f32.mrf.mxu0
    %v151 = vadd.f32 %v116, %v150
    %152 = vdwg.mxu0
    %v153 = vmax.f32 %v151, 0.0
    %v154 = vld [vmem:[#allocation8] sm:$0xff]
    %v155 = vld [vmem:[#allocation8 + $0x8] sm:$0xff]
    %v156 = vld [vmem:[#allocation8 + $0x10] sm:$0xff]
    %v157 = vld [vmem:[#allocation8 + $0x18] sm:$0xff]
    %v158 = vld [vmem:[#allocation8 + $0x20] sm:$0xff]
    %v159 = vld [vmem:[#allocation8 + $0x28] sm:$0xff]
    %v160 = vld [vmem:[#allocation8 + $0x30] sm:$0xff]
    %v161 = vld [vmem:[#allocation8 + $0x38] sm:$0xff]
    %v162 = vld [vmem:[#allocation8 + $0x40] sm:$0xff]
    %v163 = vld [vmem:[#allocation8 + $0x48] sm:$0xff]
    %v164 = vld [vmem:[#allocation8 + $0x50] sm:$0xff]
    %v165 = vld [vmem:[#allocation8 + $0x58] sm:$0xff]
    %v166 = vld [vmem:[#allocation8 + $0x60] sm:$0xff]
    %v167 = vld [vmem:[#allocation8 + $0x68] sm:$0xff]
    %v168 = vld [vmem:[#allocation8 + $0x70] sm:$0xff]
    %v169 = vld [vmem:[#allocation8 + $0x78] sm:$0xff]
    %170 = vmatpush.msra.mxu0 %v169
    %171 = vmatpush.msra.mxu0 %v168
    %172 = vmatpush.msra.mxu0 %v167
    %173 = vmatpush.msra.mxu0 %v166
    %174 = vmatpush.msra.mxu0 %v165
    %175 = vmatpush.msra.mxu0 %v164
    %176 = vmatpush.msra.mxu0 %v163
    %177 = vmatpush.msra.mxu0 %v162
    %178 = vmatpush.msra.mxu0 %v161
    %179 = vmatpush.msra.mxu0 %v160
    %180 = vmatpush.msra.mxu0 %v159
    %181 = vmatpush.msra.mxu0 %v158
    %182 = vmatpush.msra.mxu0 %v157
    %183 = vmatpush.msra.mxu0 %v156
    %184 = vmatpush.msra.mxu0 %v155
    %185 = vmatpush.msra.mxu0 %v154
    %186 = vmatmul.f32.gmra.mxu0 %v153
    %v187 = vpop.f32.mrf.mxu0
    %v188 = vadd.f32 0.0, %v187
    %189 = vdwg.mxu0
    %190 = vst [vmem:[#allocation10] sm:$0xff] %v188
    // Predicated region
    $region34: #{tpu_custom_call.1} parent=1 // pred_check
      _
    $region35: #{tpu_custom_call.1} parent=1 // pred_check_branch
      %192 = sbr.rel (0) target = $region37
    $region36: #{tpu_custom_call.1} parent=1 // pred_region
      %194 = vsyncadd [#allocation4], 0
      %s196 = sshll.u32 [#allocation10], 4
      %s197 = int_to_ptr.vmem [resolvable:$true] %s196
      %s198 = sshll.u32 %s4, 4
      %s199 = int_to_ptr.hbm [resolvable:$true] %s198
      %201 = dma.vmem_to_hbm [thread:$0]  %s197, 128, %s199, [#allocation4]
    $region37: #{tpu_custom_call.1} parent=1 // pred_fallthru
      _
    // Predicated region
    $region38: #{tpu_custom_call.1} parent=1 // pred_check
      _
    $region39: #{tpu_custom_call.1} parent=1 // pred_check_branch
      %203 = sbr.rel (0) target = $region41
    $region40: #{tpu_custom_call.1} parent=1 // pred_region
      %205 = dma.done [#allocation4], 128
    $region41: #{tpu_custom_call.1} parent=1 // pred_fallthru
      _
    %206 = vsyncpa [#allocation3], 1
    %207 = vsyncpa [#allocation6], 1
    %208 = vsyncpa [#allocation9], 1
    %209 = vsyncpa [#allocation4], 1

</llo_original>
